<compile_context>
chip_gen: v7x
topology: tpu7x:2x2x1
jax: 0.10.0
libtpu: 0.0.40
codegen_flags: <defaults>
</compile_context>

<pallas_src>
import functools

import jax
import jax.numpy as jnp
from jax.experimental import pallas as pl
from jax.experimental.pallas import tpu as pltpu


# ---------------------------------------------------------------------------
# Kernel bodies
# ---------------------------------------------------------------------------

def _mlp_step(x_ref, wgu_ref, wo_ref):
    """One (token-tile, mlp-block) contribution, f32 result (TM, H)."""
    tn = wo_ref.shape[0]
    # In-kernel activation cast: x is DMA'd in its native dtype and cast to the
    # bf16 MXU operand dtype here (no separate XLA cast pass over activations).
    x = x_ref[...].astype(wgu_ref.dtype)

    # Fused gate/up projection: one large MXU contraction, f32 accumulation.
    y = jnp.dot(x, wgu_ref[...], preferred_element_type=jnp.float32)
    gate = y[:, :tn]
    up = y[:, tn:]

    # Exact sigmoid (EUP slot is free while the MXU streams); f32 elementwise.
    hidden = gate * jax.nn.sigmoid(gate) * up

    return jnp.dot(hidden.astype(wo_ref.dtype), wo_ref[...],
                   preferred_element_type=jnp.float32)


def _base_mlp_kernel_f32out(x_ref, wgu_ref, wo_ref, o_ref):
    """f32 output: accumulate directly into the resident output block."""
    @pl.when(pl.program_id(1) == 0)
    def _init():
        o_ref[...] = jnp.zeros_like(o_ref)

    o_ref[...] += _mlp_step(x_ref, wgu_ref, wo_ref)


def _base_mlp_kernel_generic(x_ref, wgu_ref, wo_ref, o_ref, acc_ref):
    """Non-f32 output: f32 VMEM scratch accumulator + final cast/store."""
    j = pl.program_id(1)

    @pl.when(j == 0)
    def _init():
        acc_ref[...] = jnp.zeros_like(acc_ref)

    acc_ref[...] += _mlp_step(x_ref, wgu_ref, wo_ref)

    @pl.when(j == pl.num_programs(1) - 1)
    def _finalize():
        o_ref[...] = acc_ref[...].astype(o_ref.dtype)


# ---------------------------------------------------------------------------
# Weight preparation (once, outside the forward hot path)
# ---------------------------------------------------------------------------

def prepare_base_mlp_params(w_in, w_out, *, tn, dtype=jnp.bfloat16):
    """Pre-transpose / pre-fuse PyTorch-layout weights ONCE.

    w_in : (2*M, H)  torch Linear(H, 2*M).weight
    w_out: (H, M)    torch Linear(M, H).weight
    Returns:
      w_gu: (M // tn, H, 2*tn)  block j = [gate cols of block j | up cols of block j]
      wo_t: (M, H)              out_proj transposed
    """
    two_m, H = w_in.shape
    M = two_m // 2
    assert M % tn == 0, "tn must divide mlp_size"
    nj = M // tn
    wg_t = w_in[:M, :].T.reshape(H, nj, tn)   # gate half (torch .chunk order)
    wu_t = w_in[M:, :].T.reshape(H, nj, tn)   # up half
    w_gu = jnp.concatenate([wg_t, wu_t], axis=-1)         # (H, nj, 2*tn)
    w_gu = jnp.transpose(w_gu, (1, 0, 2)).astype(dtype)   # (nj, H, 2*tn)
    wo_t = w_out.T.astype(dtype)                          # (M, H)
    return w_gu, wo_t


# ---------------------------------------------------------------------------
# Generation-aware tile / VMEM selection
# ---------------------------------------------------------------------------

def _largest_divisor_le(n, cap):
    d = max(1, min(cap, n))
    while n % d:
        d -= 1
    return d


def select_tile_config(T, H, M):
    """Pick (tm, tn, vmem_limit_bytes) per TPU generation.

    This schedule re-streams the fused in_proj/out_proj weights once per token
    tile, so arithmetic intensity ~ TM flops per weight byte; TM is the lever.
    """
    kind = ""
    try:
        kind = jax.devices()[0].device_kind.lower()
    except Exception:  # pragma: no cover - CPU/interpret fallback
        pass

    if "v7" in kind:
        # 64 MiB physical VMEM per TC: smaller TN, bigger TM, leave headroom.
        tm_target, tn_target = 512, 256
        vmem_limit = 56 * 1024 * 1024
        num_cores = 2
    elif "v6" in kind:
        # 128 MiB physical: push TM toward the ~650 flops/byte ridge.
        tm_target, tn_target = 1024, 512
        vmem_limit = 100 * 1024 * 1024
        num_cores = 1
    elif "v5" in kind:
        # v5e is already near its compute roofline at modest TM.
        tm_target, tn_target = 512, 512
        vmem_limit = 100 * 1024 * 1024
        num_cores = 1
    else:
        tm_target, tn_target = 512, 512
        vmem_limit = None
        num_cores = 1

    tn = _largest_divisor_le(M, tn_target)
    tm = _largest_divisor_le(T, tm_target)

    # Megacore load-balance (v7x): keep the parallel token axis a multiple of
    # the number of TensorCores so neither core idles.
    if num_cores > 1:
        while tm > 1 and (T // tm) % num_cores != 0:
            smaller = _largest_divisor_le(T, tm - 1)
            if smaller == tm:
                break
            tm = smaller

    return tm, tn, vmem_limit


# ---------------------------------------------------------------------------
# Forward wrapper
# ---------------------------------------------------------------------------

@functools.partial(jax.jit, static_argnames=("tm", "tn", "vmem_limit_bytes"))
def base_mlp_forward(x, w_gu, wo_t, *, tm, tn, vmem_limit_bytes=None):
    """x: (B, S, H). w_gu: (M//tn, H, 2*tn) bf16. wo_t: (M, H) bf16."""
    B, S, H = x.shape
    T = B * S
    nj = w_gu.shape[0]
    M = nj * tn
    assert T % tm == 0, "tm must divide the token count"
    # TODO(synk): ragged token counts need padding / a masked last tile.

    x2d = x.reshape(T, H)          # no host-side astype: cast happens in-kernel
    out_dtype = x.dtype
    num_token_tiles = T // tm

    flops = 6 * T * H * M                      # 2*T*H*(2M) + 2*T*M*H
    transcendentals = T * M
    weight_bytes = (w_gu.size * w_gu.dtype.itemsize
                    + wo_t.size * wo_t.dtype.itemsize)
    bytes_accessed = (x2d.size * x2d.dtype.itemsize           # x read once per token tile
                      + weight_bytes * num_token_tiles        # weights re-streamed per tile
                      + T * H * jnp.dtype(out_dtype).itemsize)  # output writeback

    if out_dtype == jnp.float32:
        kernel = _base_mlp_kernel_f32out
        scratch_shapes = []                    # accumulate in resident o_ref
    else:
        kernel = _base_mlp_kernel_generic
        scratch_shapes = [pltpu.VMEM((tm, H), jnp.float32)]

    out2d = pl.pallas_call(
        kernel,
        out_shape=jax.ShapeDtypeStruct((T, H), out_dtype),
        grid=(num_token_tiles, nj),                               # reduction axis last
        in_specs=[
            pl.BlockSpec((tm, H), lambda i, j: (i, 0)),               # x tile, resident over j
            pl.BlockSpec((None, H, 2 * tn), lambda i, j: (j, 0, 0)),  # fused in_proj slab
            pl.BlockSpec((tn, H), lambda i, j: (j, 0)),               # out_proj slice
        ],
        out_specs=pl.BlockSpec((tm, H), lambda i, j: (i, 0)),         # resident across j
        scratch_shapes=scratch_shapes,
        compiler_params=pltpu.CompilerParams(
            dimension_semantics=("parallel", "arbitrary"),
            vmem_limit_bytes=vmem_limit_bytes,
        ),
        cost_estimate=pl.CostEstimate(
            flops=flops, transcendentals=transcendentals,
            bytes_accessed=bytes_accessed),
    )(x2d, w_gu, wo_t)

    return out2d.reshape(B, S, H)


# ---------------------------------------------------------------------------
# Pure-JAX reference (matches BaseMLP.forward with the kernel's bf16 MXU
# operand precision, f32 accumulation, exact sigmoid).
# ---------------------------------------------------------------------------

def _reference(x, w_in, w_out):
    xb = x.astype(jnp.bfloat16)
    w_in_b = w_in.astype(jnp.bfloat16)
    w_out_b = w_out.astype(jnp.bfloat16)
    proj = jnp.einsum("bsh,oh->bso", xb, w_in_b,
                      preferred_element_type=jnp.float32)
    gate, h = jnp.split(proj, 2, axis=-1)
    act = gate * jax.nn.sigmoid(gate)                       # silu in f32
    hidden = (act * h).astype(jnp.bfloat16)
    out = jnp.einsum("bsm,hm->bsh", hidden, w_out_b,
                     preferred_element_type=jnp.float32)
    return out.astype(x.dtype)


if __name__ == "__main__":
    # Small config consistent with BaseMLP: hidden_size=32, mlp_size=64,
    # batch=2, seq=8. Tiles clamp to the full dims at this toy size; at real
    # model sizes the generation-aware targets (TM up to 1024, TN 256-512) apply.
    B, S, H, MLP = 2, 8, 32, 64
    init_std = 0.02

    key = jax.random.PRNGKey(0)
    kx, kw1, kw2 = jax.random.split(key, 3)

    x = jax.random.normal(kx, (B, S, H), dtype=jnp.float32)
    # PyTorch Linear weight layouts: in_proj.weight (2*M, H), out_proj.weight (H, M).
    w_in = (init_std * jax.random.normal(kw1, (2 * MLP, H))).astype(jnp.float32)
    w_out = (init_std * jax.random.normal(kw2, (H, MLP))).astype(jnp.float32)

    T = B * S
    TM, TN, VMEM_LIMIT = select_tile_config(T, H, MLP)

    # Weight fusion / transpose happens once, outside the forward hot path.
    w_gu, wo_t = prepare_base_mlp_params(w_in, w_out, tn=TN)

    out = base_mlp_forward(x, w_gu, wo_t, tm=TM, tn=TN,
                           vmem_limit_bytes=VMEM_LIMIT)
    out = jax.block_until_ready(out)

    ref = _reference(x, w_in, w_out)
    assert out.shape == (B, S, H)
    max_err = float(jnp.max(jnp.abs(out - ref)))
    assert jnp.allclose(out, ref, atol=1e-4, rtol=1e-2), (
        f"mismatch vs reference (max abs err {max_err})")

    print("KERNEL_OK")
</pallas_src>

<mosaic_0001>
module attributes {stable_mosaic.version = 11 : i64} {
  func.func @_base_mlp_kernel_f32out(%arg0: i32, %arg1: i32, %arg2: memref<16x32xf32, #tpu.memory_space<vmem>>, %arg3: memref<1x32x128xbf16, #tpu.memory_space<vmem>>, %arg4: memref<64x32xbf16, #tpu.memory_space<vmem>>, %arg5: memref<16x32xf32, #tpu.memory_space<vmem>>) attributes {dimension_semantics = [#tpu.dimension_semantics<parallel>, #tpu.dimension_semantics<arbitrary>], iteration_bounds = array<i64: 1, 1>, scalar_prefetch = 0 : i64, scratch_operands = 0 : i64, tpu.core_type = #tpu.core_type<tc>, window_params = [{transform_indices = @transform_0, window_bounds = array<i64: 16, 32>}, {transform_indices = @transform_1, window_bounds = array<i64: 1, 32, 128>}, {transform_indices = @transform_2, window_bounds = array<i64: 64, 32>}, {transform_indices = @transform_3, window_bounds = array<i64: 16, 32>}]} {
    %c0_i32 = arith.constant 0 : i32
    %0 = arith.cmpi eq, %arg1, %c0_i32 : i32
    %1 = arith.extui %0 : i1 to i32
    %c0_i32_0 = arith.constant 0 : i32
    %2 = arith.cmpi ne, %1, %c0_i32_0 : i32
    scf.if %2 {
      %cst_13 = arith.constant 0.000000e+00 : f32
      %23 = vector.broadcast %cst_13 : f32 to vector<16x32xf32>
      %c0_14 = arith.constant 0 : index
      %c0_15 = arith.constant 0 : index
      %24 = vector.load %arg5[%c0_14, %c0_15] : memref<16x32xf32, #tpu.memory_space<vmem>>, vector<16x32xf32>
      tpu.vector_store %arg5[%c0_14, %c0_15], %23 {strides = array<i32>} : memref<16x32xf32, #tpu.memory_space<vmem>>, vector<16x32xf32>,
    } else {
    }
    %c0 = arith.constant 0 : index
    %c0_1 = arith.constant 0 : index
    %3 = vector.load %arg5[%c0, %c0_1] : memref<16x32xf32, #tpu.memory_space<vmem>>, vector<16x32xf32>
    %c0_2 = arith.constant 0 : index
    %c0_3 = arith.constant 0 : index
    %4 = vector.load %arg2[%c0_2, %c0_3] : memref<16x32xf32, #tpu.memory_space<vmem>>, vector<16x32xf32>
    %5 = arith.truncf %4 : vector<16x32xf32> to vector<16x32xbf16>
    %c0_4 = arith.constant 0 : index
    %c0_5 = arith.constant 0 : index
    %c0_6 = arith.constant 0 : index
    %6 = vector.load %arg3[%c0_4, %c0_5, %c0_6] : memref<1x32x128xbf16, #tpu.memory_space<vmem>>, vector<1x32x128xbf16>
    %7 = vector.shape_cast %6 : vector<1x32x128xbf16> to vector<32x128xbf16>
    %cst = arith.constant dense<0.000000e+00> : vector<16x128xf32>
    %8 = tpu.matmul %5, %7, %cst {dimension_numbers = #tpu.dot_dimension_numbers<[1], [0], [0], [1], [0, 0, 1, 1], [], []>} : vector<16x32xbf16>, vector<32x128xbf16>, vector<16x128xf32> -> vector<16x128xf32>
    %9 = vector.extract_strided_slice %8 {offsets = [0, 0], sizes = [16, 64], strides = [1, 1]} : vector<16x128xf32> to vector<16x64xf32>
    %10 = vector.extract_strided_slice %8 {offsets = [0, 64], sizes = [16, 64], strides = [1, 1]} : vector<16x128xf32> to vector<16x64xf32>
    %11 = arith.negf %9 : vector<16x64xf32>
    %12 = math.exp %11 : vector<16x64xf32>
    %cst_7 = arith.constant 1.000000e+00 : f32
    %13 = vector.broadcast %cst_7 : f32 to vector<16x64xf32>
    %14 = arith.addf %13, %12 : vector<16x64xf32>
    %15 = arith.divf %13, %14 : vector<16x64xf32>
    %16 = arith.mulf %9, %15 : vector<16x64xf32>
    %17 = arith.mulf %16, %10 : vector<16x64xf32>
    %18 = arith.truncf %17 : vector<16x64xf32> to vector<16x64xbf16>
    %c0_8 = arith.constant 0 : index
    %c0_9 = arith.constant 0 : index
    %19 = vector.load %arg4[%c0_8, %c0_9] : memref<64x32xbf16, #tpu.memory_space<vmem>>, vector<64x32xbf16>
    %cst_10 = arith.constant dense<0.000000e+00> : vector<16x32xf32>
    %20 = tpu.matmul %18, %19, %cst_10 {dimension_numbers = #tpu.dot_dimension_numbers<[1], [0], [0], [1], [0, 0, 1, 1], [], []>} : vector<16x64xbf16>, vector<64x32xbf16>, vector<16x32xf32> -> vector<16x32xf32>
    %21 = arith.addf %3, %20 : vector<16x32xf32>
    %c0_11 = arith.constant 0 : index
    %c0_12 = arith.constant 0 : index
    %22 = vector.load %arg5[%c0_11, %c0_12] : memref<16x32xf32, #tpu.memory_space<vmem>>, vector<16x32xf32>
    tpu.vector_store %arg5[%c0_11, %c0_12], %21 {strides = array<i32>} : memref<16x32xf32, #tpu.memory_space<vmem>>, vector<16x32xf32>,
    return
  }
  func.func @transform_0(%arg0: i32, %arg1: i32) -> (i32, i32) {
    %c0_i32 = arith.constant 0 : i32
    %c0_i32_0 = arith.constant 0 : i32
    return %arg0, %c0_i32 : i32, i32
  }
  func.func @transform_1(%arg0: i32, %arg1: i32) -> (i32, i32, i32) {
    %c0_i32 = arith.constant 0 : i32
    %c0_i32_0 = arith.constant 0 : i32
    %c0_i32_1 = arith.constant 0 : i32
    return %arg1, %c0_i32, %c0_i32_0 : i32, i32, i32
  }
  func.func @transform_2(%arg0: i32, %arg1: i32) -> (i32, i32) {
    %c0_i32 = arith.constant 0 : i32
    %c0_i32_0 = arith.constant 0 : i32
    return %arg1, %c0_i32 : i32, i32
  }
  func.func @transform_3(%arg0: i32, %arg1: i32) -> (i32, i32) {
    %c0_i32 = arith.constant 0 : i32
    %c0_i32_0 = arith.constant 0 : i32
    return %arg0, %c0_i32 : i32, i32
  }
}

</mosaic_0001>

<llo_original>
// kernel: base_mlp_forward.1
$region0: #{base_mlp_forward.1}
  #allocation0 [shape = 'u32[]', space=smem, size = 0x4, offset = 0x4, fixed_abs, tag = 'smem constant byte address 0x4 - core index']
  #allocation1 [shape = 'u32[144,128]{1,0:T(1,128)}', space=vmem, size = 0x12000, scoped, tag = 'internal scratch']
  %s0 = inlined_call_operand.vmem [shape: f32[16,32], index: 0, kind: input, shape index: {}]
  %s1 = inlined_call_operand.vmem [shape: bf16[1,32,128], index: 1, kind: input, shape index: {}]
  %s2 = inlined_call_operand.vmem [shape: bf16[64,32], index: 2, kind: input, shape index: {}]
  %s3 = inlined_call_operand.hbm [shape: f32[16,32], index: 3, kind: output, shape index: {}]
  %s4 = sld [smem:[#allocation0]]
  $region26: #{base_mlp_forward.1} parent=0
    _
  %s6 = ssub.s32 1, %s4
  %s7 = scalar_select 0, %s6, %s4
  $region1: #{base_mlp_forward.1} parent=0
    #allocation2 [shape = 'u8[8192]{0}', space=vmem, size = 0x2000, scoped, tag = 'output window, operand 0, single buffered']
    #allocation3 [shape = 's32[1]{0}', space=sflag, size = 0x4, scoped, tag = 'scoped memory for base_mlp_forward.1']
    %8 = vsyncpa [#allocation3], 0
    // Predicated region
    $region2: #{base_mlp_forward.1} parent=1 // pred_check
      _
    $region3: #{base_mlp_forward.1} parent=1 // pred_check_branch
      %10 = sbr.rel (0) target = $region5
    $region4: #{base_mlp_forward.1} parent=1 // pred_region
      _
    $region5: #{base_mlp_forward.1} parent=1 // pred_fallthru
      _
    // Predicated region
    $region6: #{base_mlp_forward.1} parent=1 // pred_check
      _
    $region7: #{base_mlp_forward.1} parent=1 // pred_check_branch
      %12 = sbr.rel (0) target = $region9
    $region8: #{base_mlp_forward.1} parent=1 // pred_region
      _
    $region9: #{base_mlp_forward.1} parent=1 // pred_fallthru
      _
    // Predicated region
    $region10: #{base_mlp_forward.1} parent=1 // pred_check
      _
    $region11: #{base_mlp_forward.1} parent=1 // pred_check_branch
      %14 = sbr.rel (0) target = $region13
    $region12: #{base_mlp_forward.1} parent=1 // pred_region
      _
    $region13: #{base_mlp_forward.1} parent=1 // pred_fallthru
      _
    %p16 = scmp.eq.s32.totalorder 0, 0
    // Predicated region
    $region14: #{base_mlp_forward.1} parent=1 // pred_check
      %p17 = pneg %p16
    $region15: #{base_mlp_forward.1} parent=1 // pred_check_branch
      %19 = sbr.rel (%p17) target = $region17
    $region16: #{base_mlp_forward.1} parent=1 // pred_region
      %vm20 = vcmask 261120
      %21 = vst.msk [vmem:[#allocation2] sm:$0xff] %vm20, 0.0
      %22 = vst.msk [vmem:[#allocation2 + $0x8] sm:$0xff] %vm20, 0.0
    $region17: #{base_mlp_forward.1} parent=1 // pred_fallthru
      _
    %v23 = vld [vmem:[#allocation2] sm:$0xff]
    %v24 = vld [vmem:[#allocation2 + $0x8] sm:$0xff]
    %v25 = vld [vmem:[%s0] sm:$0xff]
    %v26 = vld [vmem:[%s0 + $0x8] sm:$0xff]
    %v27 = vpack.c.bf16 %v26, %v25
    %v28 = vld [vmem:[%s1] sm:$0xf]
    %v29 = vld [vmem:[%s1 + $0x4] sm:$0xf]
    %v30 = vld [vmem:[%s1 + $0x8] sm:$0xf]
    %v31 = vld [vmem:[%s1 + $0xc] sm:$0xf]
    %v36 = vunpack.c.l.b16 %v28
    %v37 = vunpack.c.l.b16 %v29
    %v38 = vunpack.c.l.b16 %v30
    %v39 = vunpack.c.l.b16 %v31
    %v40 = vpack.c.b16 %v37, %v36
    %v41 = vpack.c.b16 %v39, %v38
    %vm44 = vcmask 261120
    %v46 = vsel %vm44, %v27, 0
    %48 = vmatprep.subr.bf16.mxu0 0
    %49 = vmatpush1.bf16.msra.mxu0 %v40
    %50 = vmatprep.subr.bf16.mxu0 0
    %51 = vmatpush1.bf16.msra.mxu0 %v41
    %52 = vmatprep.subr.bf16.mxu0 0
    %53 = vmatpush1.bf16.msra.mxu0 0
    %54 = vmatprep.subr.bf16.mxu0 0
    %55 = vmatpush1.bf16.msra.mxu0 0
    %56 = vmatprep.subr.bf16.mxu0 0
    %57 = vmatpush1.bf16.msra.mxu0 0
    %58 = vmatprep.subr.bf16.mxu0 0
    %59 = vmatpush1.bf16.msra.mxu0 0
    %60 = vmatprep.subr.bf16.mxu0 0
    %61 = vmatpush1.bf16.msra.mxu0 0
    %62 = vmatprep.subr.bf16.mxu0 0
    %63 = vmatpush1.bf16.msra.mxu0 0
    %64 = vmatprep.subr.bf16.mxu0 0
    %65 = vmatpush1.bf16.msra.mxu0 0
    %66 = vmatprep.subr.bf16.mxu0 0
    %67 = vmatpush1.bf16.msra.mxu0 0
    %68 = vmatprep.subr.bf16.mxu0 0
    %69 = vmatpush1.bf16.msra.mxu0 0
    %70 = vmatprep.subr.bf16.mxu0 0
    %71 = vmatpush1.bf16.msra.mxu0 0
    %72 = vmatprep.subr.bf16.mxu0 0
    %73 = vmatpush1.bf16.msra.mxu0 0
    %74 = vmatprep.subr.bf16.mxu0 0
    %75 = vmatpush1.bf16.msra.mxu0 0
    %76 = vmatprep.subr.bf16.mxu0 0
    %77 = vmatpush1.bf16.msra.mxu0 0
    %78 = vmatprep.subr.bf16.mxu0 0
    %79 = vmatpush1.bf16.msra.mxu0 0
    %80 = vmatprep.mubr.bf16.mxu0 0
    %81 = vmatmul.mubr.bf16.gmra.mrb[0].mxu0 %v46
    %v82 = vpop.f32.mrb[0].mxu0
    %v83 = vadd.f32 0.0, %v82
    %v84 = vpop.f32.mrb[0].mxu0
    %v85 = vpop.f32.mrb[0].mxu0
    %v86 = vadd.f32 0.0, %v85
    %v87 = vpop.f32.mrb[0].mxu0
    %88 = vdwg.mxu0
    %v89 = vxor.u32 %v83, 2147483648
    %v90 = vxor.u32 %v86, 2147483648
    %v91 = vmul.f32 %v89, 1.442695
    %v92 = vpow.pop %v91
    %v93 = vmul.f32 %v90, 1.442695
    %v94 = vpow.pop %v93
    %v95 = vadd.f32 %v92, 1.0
    %v96 = vadd.f32 %v94, 1.0
    %v97 = vrcp.pop %v95
    %v98 = vmul.f32 1.0, %v97
    %v99 = vrcp.pop %v96
    %v100 = vmul.f32 1.0, %v99
    %v101 = vmul.f32 %v83, %v98
    %v102 = vmul.f32 %v86, %v100
    %105 = vrot.lane.b32.xlu0 %v83, 64
    %v106 = vpop.permute.xlu0 %105
    %107 = vrot.lane.b32.xlu0 %v86, 64
    %v108 = vpop.permute.xlu0 %107
    %v111 = vmul.f32 %v101, %v106
    %v112 = vmul.f32 %v102, %v108
    %v113 = vpack.c.bf16 %v112, %v111
    %v114 = vld [vmem:[%s2] sm:$0xf]
    %v115 = vld [vmem:[%s2 + $0x4] sm:$0xf]
    %v116 = vld [vmem:[%s2 + $0x8] sm:$0xf]
    %v117 = vld [vmem:[%s2 + $0xc] sm:$0xf]
    %v118 = vld [vmem:[%s2 + $0x10] sm:$0xf]
    %v119 = vld [vmem:[%s2 + $0x14] sm:$0xf]
    %v120 = vld [vmem:[%s2 + $0x18] sm:$0xf]
    %v121 = vld [vmem:[%s2 + $0x1c] sm:$0xf]
    %v130 = vunpack.c.l.b16 %v114
    %v131 = vunpack.c.l.b16 %v115
    %v132 = vunpack.c.l.b16 %v116
    %v133 = vunpack.c.l.b16 %v117
    %v134 = vunpack.c.l.b16 %v118
    %v135 = vunpack.c.l.b16 %v119
    %v136 = vunpack.c.l.b16 %v120
    %v137 = vunpack.c.l.b16 %v121
    %v138 = vpack.c.b16 %v131, %v130
    %v139 = vpack.c.b16 %v133, %v132
    %v140 = vpack.c.b16 %v135, %v134
    %v141 = vpack.c.b16 %v137, %v136
    %vm146 = vcmask 523264
    %v148 = vsel %vm146, %v113, 0
    %150 = vmatprep.subr.bf16.mxu0 0
    %151 = vmatpush1.bf16.msra.mxu0 %v138
    %152 = vmatprep.subr.bf16.mxu0 0
    %153 = vmatpush1.bf16.msra.mxu0 %v139
    %154 = vmatprep.subr.bf16.mxu0 0
    %155 = vmatpush1.bf16.msra.mxu0 %v140
    %156 = vmatprep.subr.bf16.mxu0 0
    %157 = vmatpush1.bf16.msra.mxu0 %v141
    %158 = vmatprep.subr.bf16.mxu0 0
    %159 = vmatpush1.bf16.msra.mxu0 0
    %160 = vmatprep.subr.bf16.mxu0 0
    %161 = vmatpush1.bf16.msra.mxu0 0
    %162 = vmatprep.subr.bf16.mxu0 0
    %163 = vmatpush1.bf16.msra.mxu0 0
    %164 = vmatprep.subr.bf16.mxu0 0
    %165 = vmatpush1.bf16.msra.mxu0 0
    %166 = vmatprep.subr.bf16.mxu0 0
    %167 = vmatpush1.bf16.msra.mxu0 0
    %168 = vmatprep.subr.bf16.mxu0 0
    %169 = vmatpush1.bf16.msra.mxu0 0
    %170 = vmatprep.subr.bf16.mxu0 0
    %171 = vmatpush1.bf16.msra.mxu0 0
    %172 = vmatprep.subr.bf16.mxu0 0
    %173 = vmatpush1.bf16.msra.mxu0 0
    %174 = vmatprep.subr.bf16.mxu0 0
    %175 = vmatpush1.bf16.msra.mxu0 0
    %176 = vmatprep.subr.bf16.mxu0 0
    %177 = vmatpush1.bf16.msra.mxu0 0
    %178 = vmatprep.subr.bf16.mxu0 0
    %179 = vmatpush1.bf16.msra.mxu0 0
    %180 = vmatprep.subr.bf16.mxu0 0
    %181 = vmatpush1.bf16.msra.mxu0 0
    %182 = vmatprep.mubr.bf16.mxu0 0
    %183 = vmatmul.mubr.bf16.gmra.mrb[0].mxu0 %v148
    %v184 = vpop.f32.mrb[0].mxu0
    %v185 = vadd.f32 0.0, %v184
    %v186 = vpop.f32.mrb[0].mxu0
    %v187 = vpop.f32.mrb[0].mxu0
    %v188 = vadd.f32 0.0, %v187
    %v189 = vpop.f32.mrb[0].mxu0
    %190 = vdwg.mxu0
    %v191 = vadd.f32 %v23, %v185
    %v192 = vadd.f32 %v24, %v188
    %193 = vst.msk [vmem:[#allocation2] sm:$0xff] %vm44, %v191
    %194 = vst.msk [vmem:[#allocation2 + $0x8] sm:$0xff] %vm44, %v192
    // Predicated region
    $region18: #{base_mlp_forward.1} parent=1 // pred_check
      _
    $region19: #{base_mlp_forward.1} parent=1 // pred_check_branch
      %196 = sbr.rel (0) target = $region21
    $region20: #{base_mlp_forward.1} parent=1 // pred_region
      %s198 = ssub.s32 256, 256
      %199 = vsyncadd [#allocation3], %s198
      %s200 = sshll.u32 [#allocation2], 4
      %s201 = int_to_ptr.vmem [resolvable:$true] %s200
      %206 = dma.vmem_to_hbm [thread:$0]  %s201, 256, %s3, [#allocation3], 128, 128, 8
    $region21: #{base_mlp_forward.1} parent=1 // pred_fallthru
      _
    // Predicated region
    $region22: #{base_mlp_forward.1} parent=1 // pred_check
      _
    $region23: #{base_mlp_forward.1} parent=1 // pred_check_branch
      %208 = sbr.rel (0) target = $region25
    $region24: #{base_mlp_forward.1} parent=1 // pred_region
      %209 = dma.done [#allocation3], 256
    $region25: #{base_mlp_forward.1} parent=1 // pred_fallthru
      _
    %210 = vsyncpa [#allocation3], 1

</llo_original>
